<compile_context>
chip_gen: v7x
topology: tpu7x:2x2x1
jax: 0.10.0
libtpu: 0.0.40
codegen_flags: <defaults>
</compile_context>

<pallas_src>
import functools

import jax
import jax.numpy as jnp
from jax import lax
from jax.experimental import pallas as pl
from jax.experimental.pallas import tpu as pltpu

COMPUTE_DTYPE = jnp.bfloat16   # MXU input dtype; accumulation stays f32


# ----------------------------- Pallas kernels --------------------------------
def _conv_stats_kernel(a_ref, w_ref, y_ref, stats_ref):
    """(Mt, Kp) @ (Kp, Cp) -> f32 conv tile + per-channel sum / sum-of-squares."""
    acc = jnp.dot(a_ref[...], w_ref[...], preferred_element_type=jnp.float32)
    y_ref[...] = acc

    @pl.when(pl.program_id(0) == 0)
    def _():
        stats_ref[...] = jnp.zeros_like(stats_ref)

    s = jnp.sum(acc, axis=0, keepdims=True)          # (1, Cp)
    sq = jnp.sum(acc * acc, axis=0, keepdims=True)   # (1, Cp)
    pad = jnp.zeros((stats_ref.shape[0] - 2, acc.shape[1]), jnp.float32)
    stats_ref[...] += jnp.concatenate([s, sq, pad], axis=0)


def _bn_apply_kernel(y_ref, scale_ref, shift_ref, o_ref, *, apply_relu):
    out = y_ref[...] * scale_ref[...] + shift_ref[...]
    if apply_relu:
        out = jnp.maximum(out, 0.0)
    o_ref[...] = out.astype(o_ref.dtype)


def _bn_apply_res_kernel(y_ref, scale_ref, shift_ref, res_ref, o_ref, *, apply_relu):
    out = y_ref[...] * scale_ref[...] + shift_ref[...] + res_ref[...]
    if apply_relu:
        out = jnp.maximum(out, 0.0)
    o_ref[...] = out.astype(o_ref.dtype)


# ------------------------------ glue (JAX) -----------------------------------
def _round_up(x, m):
    return (x + m - 1) // m * m


def _im2col(x_nhwc, k, stride, padding, dtype):
    N, H, W, C = x_nhwc.shape
    xp = jnp.pad(x_nhwc.astype(dtype),
                 ((0, 0), (padding, padding), (padding, padding), (0, 0)))
    Ho = (H + 2 * padding - k) // stride + 1
    Wo = (W + 2 * padding - k) // stride + 1
    cols = []
    for di in range(k):
        for dj in range(k):
            cols.append(xp[:, di:di + stride * Ho:stride,
                           dj:dj + stride * Wo:stride, :])
    a = jnp.concatenate(cols, axis=-1)           # (N, Ho, Wo, k*k*C), order (di, dj, c)
    return a.reshape(N * Ho * Wo, k * k * C), Ho, Wo


def conv_bn_pallas(x_nhwc, w_oihw, gamma, beta, *, stride, padding,
                   residual=None, apply_relu=False, eps=1e-5, m_tile=512):
    """Fused conv2d(no bias) + BatchNorm2d(train) [+ residual] [+ ReLU]."""
    N, H, W, Cin = x_nhwc.shape
    Cout, _, k, _ = w_oihw.shape

    a, Ho, Wo = _im2col(x_nhwc, k, stride, padding, COMPUTE_DTYPE)
    M, K = a.shape
    Cp = _round_up(Cout, 128)                    # lane-dense output channels
    Kp = _round_up(K, 128)                       # lane-dense contraction dim
    Mt = min(m_tile, _round_up(M, 16))           # M tile (multiple of 16 for bf16)
    Mp = _round_up(M, Mt)
    num_tiles = Mp // Mt

    a_p = jnp.zeros((Mp, Kp), COMPUTE_DTYPE).at[:M, :K].set(a)
    # PyTorch weight (Cout, Cin, kh, kw) -> (kh, kw, Cin, Cout) -> (K, Cout),
    # matching the im2col patch ordering (di, dj, c).
    wm = jnp.transpose(w_oihw, (2, 3, 1, 0)).reshape(K, Cout).astype(COMPUTE_DTYPE)
    w_p = jnp.zeros((Kp, Cp), COMPUTE_DTYPE).at[:K, :Cout].set(wm)

    # ---- pass 1: conv matmul + per-channel batch-stat accumulation ----------
    y, stats = pl.pallas_call(
        _conv_stats_kernel,
        grid=(num_tiles,),
        in_specs=[pl.BlockSpec((Mt, Kp), lambda i: (i, 0)),
                  pl.BlockSpec((Kp, Cp), lambda i: (0, 0))],     # weights resident
        out_specs=[pl.BlockSpec((Mt, Cp), lambda i: (i, 0)),
                   pl.BlockSpec((8, Cp), lambda i: (0, 0))],     # revisited accumulator
        out_shape=(jax.ShapeDtypeStruct((Mp, Cp), jnp.float32),
                   jax.ShapeDtypeStruct((8, Cp), jnp.float32)),
        compiler_params=pltpu.CompilerParams(
            dimension_semantics=("arbitrary",)),                 # stats reduction axis
    )(a_p, w_p)

    # ---- fold BN into per-channel scale/shift (tiny, done once) -------------
    mean = stats[0:1, :] / M                      # padded rows are exactly zero
    ex2 = stats[1:2, :] / M
    var = jnp.maximum(ex2 - mean * mean, 0.0)     # biased variance (train mode)
    g_p = jnp.zeros((1, Cp), jnp.float32).at[0, :Cout].set(gamma.astype(jnp.float32))
    b_p = jnp.zeros((1, Cp), jnp.float32).at[0, :Cout].set(beta.astype(jnp.float32))
    scale = g_p * lax.rsqrt(var + eps)
    shift = b_p - mean * scale

    # ---- pass 2: normalize [+ residual] [+ ReLU] -----------------------------
    in_specs = [pl.BlockSpec((Mt, Cp), lambda i: (i, 0)),
                pl.BlockSpec((1, Cp), lambda i: (0, 0)),
                pl.BlockSpec((1, Cp), lambda i: (0, 0))]
    inputs = [y, scale, shift]
    if residual is not None:
        res = residual.astype(jnp.float32).reshape(M, Cout)
        res_p = jnp.zeros((Mp, Cp), jnp.float32).at[:M, :Cout].set(res)
        in_specs.append(pl.BlockSpec((Mt, Cp), lambda i: (i, 0)))
        inputs.append(res_p)
        kernel = functools.partial(_bn_apply_res_kernel, apply_relu=apply_relu)
    else:
        kernel = functools.partial(_bn_apply_kernel, apply_relu=apply_relu)

    out = pl.pallas_call(
        kernel,
        grid=(num_tiles,),
        in_specs=in_specs,
        out_specs=pl.BlockSpec((Mt, Cp), lambda i: (i, 0)),
        out_shape=jax.ShapeDtypeStruct((Mp, Cp), jnp.float32),
        compiler_params=pltpu.CompilerParams(
            dimension_semantics=("parallel",)),
    )(*inputs)

    return out[:M, :Cout].reshape(N, Ho, Wo, Cout)


def res_module_forward(x_nchw, params, *, kernel_size, stride, padding,
                       is_empty_skip):
    x = jnp.transpose(x_nchw, (0, 2, 3, 1))                   # NCHW -> NHWC
    y1 = conv_bn_pallas(x, params["w1"], params["g1"], params["b1"],
                        stride=stride, padding=padding, apply_relu=True)
    if is_empty_skip:
        # identity skip is only shape-compatible when stride==1 and Cin==Cout
        if stride != 1 or x.shape[-1] != params["w1"].shape[0]:
            raise ValueError("identity skip requires stride==1 and Cin==Cout")
        sc = x.astype(jnp.float32)
    else:
        sc = conv_bn_pallas(x, params["ws"], params["gs"], params["bs"],
                            stride=stride, padding=padding, apply_relu=False)
    out = conv_bn_pallas(y1, params["w2"], params["g2"], params["b2"],
                         stride=1, padding=(kernel_size - 1) // 2,
                         residual=sc, apply_relu=True)
    return jnp.transpose(out, (0, 3, 1, 2))                   # NHWC -> NCHW


# ------------------------- pure-JAX reference --------------------------------
def _conv_nhwc(x, w_oihw, stride, padding):
    # Same bf16 input quantization as the kernel path, f32 accumulation.
    return lax.conv_general_dilated(
        x.astype(COMPUTE_DTYPE),
        jnp.transpose(w_oihw, (2, 3, 1, 0)).astype(COMPUTE_DTYPE),
        window_strides=(stride, stride),
        padding=[(padding, padding), (padding, padding)],
        dimension_numbers=("NHWC", "HWIO", "NHWC"),
        preferred_element_type=jnp.float32)


def _bn_train(y, gamma, beta, eps=1e-5):
    mean = jnp.mean(y, axis=(0, 1, 2), keepdims=True)
    var = jnp.mean(jnp.square(y - mean), axis=(0, 1, 2), keepdims=True)
    return (y - mean) * gamma * lax.rsqrt(var + eps) + beta


def res_module_ref(x_nchw, params, *, kernel_size, stride, padding,
                   is_empty_skip):
    x = jnp.transpose(x_nchw, (0, 2, 3, 1))
    y1 = jax.nn.relu(_bn_train(_conv_nhwc(x, params["w1"], stride, padding),
                               params["g1"], params["b1"]))
    y2 = _bn_train(_conv_nhwc(y1, params["w2"], 1, (kernel_size - 1) // 2),
                   params["g2"], params["b2"])
    sc = x if is_empty_skip else _bn_train(
        _conv_nhwc(x, params["ws"], stride, padding), params["gs"], params["bs"])
    return jnp.transpose(jax.nn.relu(y2 + sc), (0, 3, 1, 2))


# ---------------------------------- main --------------------------------------
if __name__ == "__main__":
    key = jax.random.PRNGKey(0)
    N, Cin, Cout, H, W = 2, 4, 8, 16, 16
    kernel_size, stride, padding = 3, 2, 1
    is_empty_skip = False

    def kaiming(k_, cout, cin, ks):
        std = (2.0 / (cin * ks * ks)) ** 0.5    # kaiming_normal_, fan_in, gain sqrt(2)
        return std * jax.random.normal(k_, (cout, cin, ks, ks), jnp.float32)

    k1, k2, k3, kx = jax.random.split(key, 4)
    params = {
        "w1": kaiming(k1, Cout, Cin, kernel_size),
        "g1": jnp.ones((Cout,), jnp.float32), "b1": jnp.zeros((Cout,), jnp.float32),
        "w2": kaiming(k2, Cout, Cout, kernel_size),
        "g2": jnp.ones((Cout,), jnp.float32), "b2": jnp.zeros((Cout,), jnp.float32),
        "ws": kaiming(k3, Cout, Cin, kernel_size),
        "gs": jnp.ones((Cout,), jnp.float32), "bs": jnp.zeros((Cout,), jnp.float32),
    }
    x = jax.random.normal(kx, (N, Cin, H, W), jnp.float32)

    fwd = jax.jit(functools.partial(
        res_module_forward, kernel_size=kernel_size, stride=stride,
        padding=padding, is_empty_skip=is_empty_skip))
    out = jax.block_until_ready(fwd(x, params))
    ref = res_module_ref(x, params, kernel_size=kernel_size, stride=stride,
                         padding=padding, is_empty_skip=is_empty_skip)

    assert out.shape == (N, Cout, H // stride, W // stride), out.shape
    err = float(jnp.max(jnp.abs(out - ref)))
    assert err < 1e-3, f"max abs error {err}"
    print("KERNEL_OK")
</pallas_src>

<mosaic_0001>
module attributes {stable_mosaic.version = 11 : i64} {
  func.func @_conv_stats_kernel(%arg0: i32, %arg1: memref<128x128xbf16, #tpu.memory_space<vmem>>, %arg2: memref<128x128xbf16, #tpu.memory_space<vmem>>, %arg3: memref<128x128xf32, #tpu.memory_space<vmem>>, %arg4: memref<8x128xf32, #tpu.memory_space<vmem>>) attributes {dimension_semantics = [#tpu.dimension_semantics<arbitrary>], iteration_bounds = array<i64: 1>, scalar_prefetch = 0 : i64, scratch_operands = 0 : i64, tpu.core_type = #tpu.core_type<tc>, window_params = [{transform_indices = @transform_0, window_bounds = array<i64: 128, 128>}, {pipeline_mode = #tpu.pipeline_mode<synchronous>, transform_indices = @transform_1, window_bounds = array<i64: 128, 128>}, {transform_indices = @transform_2, window_bounds = array<i64: 128, 128>}, {pipeline_mode = #tpu.pipeline_mode<synchronous>, transform_indices = @transform_3, window_bounds = array<i64: 8, 128>}]} {
    %c0 = arith.constant 0 : index
    %c0_0 = arith.constant 0 : index
    %0 = vector.load %arg1[%c0, %c0_0] : memref<128x128xbf16, #tpu.memory_space<vmem>>, vector<128x128xbf16>
    %c0_1 = arith.constant 0 : index
    %c0_2 = arith.constant 0 : index
    %1 = vector.load %arg2[%c0_1, %c0_2] : memref<128x128xbf16, #tpu.memory_space<vmem>>, vector<128x128xbf16>
    %cst = arith.constant dense<0.000000e+00> : vector<128x128xf32>
    %2 = tpu.matmul %0, %1, %cst {dimension_numbers = #tpu.dot_dimension_numbers<[1], [0], [0], [1], [0, 0, 1, 1], [], []>} : vector<128x128xbf16>, vector<128x128xbf16>, vector<128x128xf32> -> vector<128x128xf32>
    %c0_3 = arith.constant 0 : index
    %c0_4 = arith.constant 0 : index
    %3 = vector.load %arg3[%c0_3, %c0_4] : memref<128x128xf32, #tpu.memory_space<vmem>>, vector<128x128xf32>
    tpu.vector_store %arg3[%c0_3, %c0_4], %2 {strides = array<i32>} : memref<128x128xf32, #tpu.memory_space<vmem>>, vector<128x128xf32>,
    %c0_i32 = arith.constant 0 : i32
    %4 = arith.cmpi eq, %arg0, %c0_i32 : i32
    %5 = arith.extui %4 : i1 to i32
    %c0_i32_5 = arith.constant 0 : i32
    %6 = arith.cmpi ne, %5, %c0_i32_5 : i32
    scf.if %6 {
      %cst_13 = arith.constant 0.000000e+00 : f32
      %17 = vector.broadcast %cst_13 : f32 to vector<8x128xf32>
      %c0_14 = arith.constant 0 : index
      %c0_15 = arith.constant 0 : index
      %18 = vector.load %arg4[%c0_14, %c0_15] : memref<8x128xf32, #tpu.memory_space<vmem>>, vector<8x128xf32>
      tpu.vector_store %arg4[%c0_14, %c0_15], %17 {strides = array<i32>} : memref<8x128xf32, #tpu.memory_space<vmem>>, vector<8x128xf32>,
    } else {
    }
    %cst_6 = arith.constant dense<0.000000e+00> : vector<128xf32>
    %7 = vector.multi_reduction <add>, %2, %cst_6 [0] : vector<128x128xf32> to vector<128xf32>
    %8 = vector.shape_cast %7 : vector<128xf32> to vector<1x128xf32>
    %9 = arith.mulf %2, %2 : vector<128x128xf32>
    %cst_7 = arith.constant dense<0.000000e+00> : vector<128xf32>
    %10 = vector.multi_reduction <add>, %9, %cst_7 [0] : vector<128x128xf32> to vector<128xf32>
    %11 = vector.shape_cast %10 : vector<128xf32> to vector<1x128xf32>
    %cst_8 = arith.constant 0.000000e+00 : f32
    %12 = vector.broadcast %cst_8 : f32 to vector<6x128xf32>
    %c0_9 = arith.constant 0 : index
    %c0_10 = arith.constant 0 : index
    %13 = vector.load %arg4[%c0_9, %c0_10] : memref<8x128xf32, #tpu.memory_space<vmem>>, vector<8x128xf32>
    %14 = tpu.concatenate %8, %11, %12 in 0 : vector<1x128xf32>, vector<1x128xf32>, vector<6x128xf32> -> vector<8x128xf32>
    %15 = arith.addf %13, %14 : vector<8x128xf32>
    %c0_11 = arith.constant 0 : index
    %c0_12 = arith.constant 0 : index
    %16 = vector.load %arg4[%c0_11, %c0_12] : memref<8x128xf32, #tpu.memory_space<vmem>>, vector<8x128xf32>
    tpu.vector_store %arg4[%c0_11, %c0_12], %15 {strides = array<i32>} : memref<8x128xf32, #tpu.memory_space<vmem>>, vector<8x128xf32>,
    return
  }
  func.func @transform_0(%arg0: i32) -> (i32, i32) {
    %c0_i32 = arith.constant 0 : i32
    %c0_i32_0 = arith.constant 0 : i32
    return %arg0, %c0_i32 : i32, i32
  }
  func.func @transform_1(%arg0: i32) -> (i32, i32) {
    %c0_i32 = arith.constant 0 : i32
    %c0_i32_0 = arith.constant 0 : i32
    %c0_i32_1 = arith.constant 0 : i32
    return %c0_i32, %c0_i32_0 : i32, i32
  }
  func.func @transform_2(%arg0: i32) -> (i32, i32) {
    %c0_i32 = arith.constant 0 : i32
    %c0_i32_0 = arith.constant 0 : i32
    return %arg0, %c0_i32 : i32, i32
  }
  func.func @transform_3(%arg0: i32) -> (i32, i32) {
    %c0_i32 = arith.constant 0 : i32
    %c0_i32_0 = arith.constant 0 : i32
    %c0_i32_1 = arith.constant 0 : i32
    return %c0_i32, %c0_i32_0 : i32, i32
  }
}

module attributes {stable_mosaic.version = 11 : i64} {
  func.func @_bn_apply_kernel(%arg0: i32, %arg1: memref<128x128xf32, #tpu.memory_space<vmem>>, %arg2: memref<1x128xf32, #tpu.memory_space<vmem>>, %arg3: memref<1x128xf32, #tpu.memory_space<vmem>>, %arg4: memref<128x128xf32, #tpu.memory_space<vmem>>) attributes {dimension_semantics = [#tpu.dimension_semantics<parallel>], iteration_bounds = array<i64: 1>, scalar_prefetch = 0 : i64, scratch_operands = 0 : i64, tpu.core_type = #tpu.core_type<tc>, window_params = [{transform_indices = @transform_0, window_bounds = array<i64: 128, 128>}, {pipeline_mode = #tpu.pipeline_mode<synchronous>, transform_indices = @transform_1, window_bounds = array<i64: 1, 128>}, {pipeline_mode = #tpu.pipeline_mode<synchronous>, transform_indices = @transform_2, window_bounds = array<i64: 1, 128>}, {transform_indices = @transform_3, window_bounds = array<i64: 128, 128>}]} {
    %c0 = arith.constant 0 : index
    %c0_0 = arith.constant 0 : index
    %0 = vector.load %arg1[%c0, %c0_0] : memref<128x128xf32, #tpu.memory_space<vmem>>, vector<128x128xf32>
    %c0_1 = arith.constant 0 : index
    %c0_2 = arith.constant 0 : index
    %1 = vector.load %arg2[%c0_1, %c0_2] : memref<1x128xf32, #tpu.memory_space<vmem>>, vector<1x128xf32>
    %2 = vector.broadcast %1 : vector<1x128xf32> to vector<128x128xf32>
    %3 = arith.mulf %0, %2 : vector<128x128xf32>
    %c0_3 = arith.constant 0 : index
    %c0_4 = arith.constant 0 : index
    %4 = vector.load %arg3[%c0_3, %c0_4] : memref<1x128xf32, #tpu.memory_space<vmem>>, vector<1x128xf32>
    %5 = vector.broadcast %4 : vector<1x128xf32> to vector<128x128xf32>
    %6 = arith.addf %3, %5 : vector<128x128xf32>
    %cst = arith.constant 0.000000e+00 : f32
    %7 = vector.broadcast %cst : f32 to vector<128x128xf32>
    %8 = arith.maximumf %6, %7 : vector<128x128xf32>
    %c0_5 = arith.constant 0 : index
    %c0_6 = arith.constant 0 : index
    %9 = vector.load %arg4[%c0_5, %c0_6] : memref<128x128xf32, #tpu.memory_space<vmem>>, vector<128x128xf32>
    tpu.vector_store %arg4[%c0_5, %c0_6], %8 {strides = array<i32>} : memref<128x128xf32, #tpu.memory_space<vmem>>, vector<128x128xf32>,
    return
  }
  func.func @transform_0(%arg0: i32) -> (i32, i32) {
    %c0_i32 = arith.constant 0 : i32
    %c0_i32_0 = arith.constant 0 : i32
    return %arg0, %c0_i32 : i32, i32
  }
  func.func @transform_1(%arg0: i32) -> (i32, i32) {
    %c0_i32 = arith.constant 0 : i32
    %c0_i32_0 = arith.constant 0 : i32
    %c0_i32_1 = arith.constant 0 : i32
    return %c0_i32, %c0_i32_0 : i32, i32
  }
  func.func @transform_2(%arg0: i32) -> (i32, i32) {
    %c0_i32 = arith.constant 0 : i32
    %c0_i32_0 = arith.constant 0 : i32
    %c0_i32_1 = arith.constant 0 : i32
    return %c0_i32, %c0_i32_0 : i32, i32
  }
  func.func @transform_3(%arg0: i32) -> (i32, i32) {
    %c0_i32 = arith.constant 0 : i32
    %c0_i32_0 = arith.constant 0 : i32
    return %arg0, %c0_i32 : i32, i32
  }
}

module attributes {stable_mosaic.version = 11 : i64} {
  func.func @_bn_apply_res_kernel(%arg0: i32, %arg1: memref<128x128xf32, #tpu.memory_space<vmem>>, %arg2: memref<1x128xf32, #tpu.memory_space<vmem>>, %arg3: memref<1x128xf32, #tpu.memory_space<vmem>>, %arg4: memref<128x128xf32, #tpu.memory_space<vmem>>, %arg5: memref<128x128xf32, #tpu.memory_space<vmem>>) attributes {dimension_semantics = [#tpu.dimension_semantics<parallel>], iteration_bounds = array<i64: 1>, scalar_prefetch = 0 : i64, scratch_operands = 0 : i64, tpu.core_type = #tpu.core_type<tc>, window_params = [{transform_indices = @transform_0, window_bounds = array<i64: 128, 128>}, {pipeline_mode = #tpu.pipeline_mode<synchronous>, transform_indices = @transform_1, window_bounds = array<i64: 1, 128>}, {pipeline_mode = #tpu.pipeline_mode<synchronous>, transform_indices = @transform_2, window_bounds = array<i64: 1, 128>}, {transform_indices = @transform_3, window_bounds = array<i64: 128, 128>}, {transform_indices = @transform_4, window_bounds = array<i64: 128, 128>}]} {
    %c0 = arith.constant 0 : index
    %c0_0 = arith.constant 0 : index
    %0 = vector.load %arg1[%c0, %c0_0] : memref<128x128xf32, #tpu.memory_space<vmem>>, vector<128x128xf32>
    %c0_1 = arith.constant 0 : index
    %c0_2 = arith.constant 0 : index
    %1 = vector.load %arg2[%c0_1, %c0_2] : memref<1x128xf32, #tpu.memory_space<vmem>>, vector<1x128xf32>
    %2 = vector.broadcast %1 : vector<1x128xf32> to vector<128x128xf32>
    %3 = arith.mulf %0, %2 : vector<128x128xf32>
    %c0_3 = arith.constant 0 : index
    %c0_4 = arith.constant 0 : index
    %4 = vector.load %arg3[%c0_3, %c0_4] : memref<1x128xf32, #tpu.memory_space<vmem>>, vector<1x128xf32>
    %5 = vector.broadcast %4 : vector<1x128xf32> to vector<128x128xf32>
    %6 = arith.addf %3, %5 : vector<128x128xf32>
    %c0_5 = arith.constant 0 : index
    %c0_6 = arith.constant 0 : index
    %7 = vector.load %arg4[%c0_5, %c0_6] : memref<128x128xf32, #tpu.memory_space<vmem>>, vector<128x128xf32>
    %8 = arith.addf %6, %7 : vector<128x128xf32>
    %cst = arith.constant 0.000000e+00 : f32
    %9 = vector.broadcast %cst : f32 to vector<128x128xf32>
    %10 = arith.maximumf %8, %9 : vector<128x128xf32>
    %c0_7 = arith.constant 0 : index
    %c0_8 = arith.constant 0 : index
    %11 = vector.load %arg5[%c0_7, %c0_8] : memref<128x128xf32, #tpu.memory_space<vmem>>, vector<128x128xf32>
    tpu.vector_store %arg5[%c0_7, %c0_8], %10 {strides = array<i32>} : memref<128x128xf32, #tpu.memory_space<vmem>>, vector<128x128xf32>,
    return
  }
  func.func @transform_0(%arg0: i32) -> (i32, i32) {
    %c0_i32 = arith.constant 0 : i32
    %c0_i32_0 = arith.constant 0 : i32
    return %arg0, %c0_i32 : i32, i32
  }
  func.func @transform_1(%arg0: i32) -> (i32, i32) {
    %c0_i32 = arith.constant 0 : i32
    %c0_i32_0 = arith.constant 0 : i32
    %c0_i32_1 = arith.constant 0 : i32
    return %c0_i32, %c0_i32_0 : i32, i32
  }
  func.func @transform_2(%arg0: i32) -> (i32, i32) {
    %c0_i32 = arith.constant 0 : i32
    %c0_i32_0 = arith.constant 0 : i32
    %c0_i32_1 = arith.constant 0 : i32
    return %c0_i32, %c0_i32_0 : i32, i32
  }
  func.func @transform_3(%arg0: i32) -> (i32, i32) {
    %c0_i32 = arith.constant 0 : i32
    %c0_i32_0 = arith.constant 0 : i32
    return %arg0, %c0_i32 : i32, i32
  }
  func.func @transform_4(%arg0: i32) -> (i32, i32) {
    %c0_i32 = arith.constant 0 : i32
    %c0_i32_0 = arith.constant 0 : i32
    return %arg0, %c0_i32 : i32, i32
  }
}

module attributes {stable_mosaic.version = 11 : i64} {
  func.func @_bn_apply_kernel(%arg0: i32, %arg1: memref<128x128xf32, #tpu.memory_space<vmem>>, %arg2: memref<1x128xf32, #tpu.memory_space<vmem>>, %arg3: memref<1x128xf32, #tpu.memory_space<vmem>>, %arg4: memref<128x128xf32, #tpu.memory_space<vmem>>) attributes {dimension_semantics = [#tpu.dimension_semantics<parallel>], iteration_bounds = array<i64: 1>, scalar_prefetch = 0 : i64, scratch_operands = 0 : i64, tpu.core_type = #tpu.core_type<tc>, window_params = [{transform_indices = @transform_0, window_bounds = array<i64: 128, 128>}, {pipeline_mode = #tpu.pipeline_mode<synchronous>, transform_indices = @transform_1, window_bounds = array<i64: 1, 128>}, {pipeline_mode = #tpu.pipeline_mode<synchronous>, transform_indices = @transform_2, window_bounds = array<i64: 1, 128>}, {transform_indices = @transform_3, window_bounds = array<i64: 128, 128>}]} {
    %c0 = arith.constant 0 : index
    %c0_0 = arith.constant 0 : index
    %0 = vector.load %arg1[%c0, %c0_0] : memref<128x128xf32, #tpu.memory_space<vmem>>, vector<128x128xf32>
    %c0_1 = arith.constant 0 : index
    %c0_2 = arith.constant 0 : index
    %1 = vector.load %arg2[%c0_1, %c0_2] : memref<1x128xf32, #tpu.memory_space<vmem>>, vector<1x128xf32>
    %2 = vector.broadcast %1 : vector<1x128xf32> to vector<128x128xf32>
    %3 = arith.mulf %0, %2 : vector<128x128xf32>
    %c0_3 = arith.constant 0 : index
    %c0_4 = arith.constant 0 : index
    %4 = vector.load %arg3[%c0_3, %c0_4] : memref<1x128xf32, #tpu.memory_space<vmem>>, vector<1x128xf32>
    %5 = vector.broadcast %4 : vector<1x128xf32> to vector<128x128xf32>
    %6 = arith.addf %3, %5 : vector<128x128xf32>
    %c0_5 = arith.constant 0 : index
    %c0_6 = arith.constant 0 : index
    %7 = vector.load %arg4[%c0_5, %c0_6] : memref<128x128xf32, #tpu.memory_space<vmem>>, vector<128x128xf32>
    tpu.vector_store %arg4[%c0_5, %c0_6], %6 {strides = array<i32>} : memref<128x128xf32, #tpu.memory_space<vmem>>, vector<128x128xf32>,
    return
  }
  func.func @transform_0(%arg0: i32) -> (i32, i32) {
    %c0_i32 = arith.constant 0 : i32
    %c0_i32_0 = arith.constant 0 : i32
    return %arg0, %c0_i32 : i32, i32
  }
  func.func @transform_1(%arg0: i32) -> (i32, i32) {
    %c0_i32 = arith.constant 0 : i32
    %c0_i32_0 = arith.constant 0 : i32
    %c0_i32_1 = arith.constant 0 : i32
    return %c0_i32, %c0_i32_0 : i32, i32
  }
  func.func @transform_2(%arg0: i32) -> (i32, i32) {
    %c0_i32 = arith.constant 0 : i32
    %c0_i32_0 = arith.constant 0 : i32
    %c0_i32_1 = arith.constant 0 : i32
    return %c0_i32, %c0_i32_0 : i32, i32
  }
  func.func @transform_3(%arg0: i32) -> (i32, i32) {
    %c0_i32 = arith.constant 0 : i32
    %c0_i32_0 = arith.constant 0 : i32
    return %arg0, %c0_i32 : i32, i32
  }
}

</mosaic_0001>

<llo_original>
// kernel: res_module_forward.6
$region0: #{res_module_forward.6}
  #allocation0 [shape = 'u32[]', space=smem, size = 0x4, offset = 0x4, fixed_abs, tag = 'smem constant byte address 0x4 - core index']
  #allocation1 [shape = 'u32[144,128]{1,0:T(1,128)}', space=vmem, size = 0x12000, scoped, tag = 'internal scratch']
  %s0 = inlined_call_operand.vmem [shape: bf16[128,128], index: 0, kind: input, shape index: {}]
  %s1 = inlined_call_operand.vmem [shape: bf16[128,128], index: 1, kind: input, shape index: {}]
  %s2 = inlined_call_operand.vmem [shape: f32[128,128], index: 2, kind: output, shape index: {0}]
  %s3 = inlined_call_operand.vmem [shape: f32[8,128], index: 3, kind: output, shape index: {1}]
  %4 = xla_tuple %s2, %s3
  %s5 = sld [smem:[#allocation0]]
  $region30: #{res_module_forward.6} parent=0
    _
  %s7 = ssub.s32 1, %s5
  %s8 = scalar_select 0, %s7, %s5
  // Predicated region
  $region2: #{res_module_forward.6} parent=0 // pred_check
    _
  $region3: #{res_module_forward.6} parent=0 // pred_check_branch
    %10 = sbr.rel (0) target = $region5
  $region4: #{res_module_forward.6} parent=0 // pred_region
    _
  $region5: #{res_module_forward.6} parent=0 // pred_fallthru
    _
  // Predicated region
  $region6: #{res_module_forward.6} parent=0 // pred_check
    _
  $region7: #{res_module_forward.6} parent=0 // pred_check_branch
    %12 = sbr.rel (0) target = $region9
  $region8: #{res_module_forward.6} parent=0 // pred_region
    _
  $region9: #{res_module_forward.6} parent=0 // pred_fallthru
    _
  %v14 = vld [vmem:[%s0] sm:$0xf]
  %v15 = vld [vmem:[%s0 + $0x4] sm:$0xf]
  %v16 = vld [vmem:[%s0 + $0x8] sm:$0xf]
  %v17 = vld [vmem:[%s0 + $0xc] sm:$0xf]
  %v18 = vld [vmem:[%s0 + $0x10] sm:$0xf]
  %v19 = vld [vmem:[%s0 + $0x14] sm:$0xf]
  %v20 = vld [vmem:[%s0 + $0x18] sm:$0xf]
  %v21 = vld [vmem:[%s0 + $0x1c] sm:$0xf]
  %v22 = vld [vmem:[%s0 + $0x20] sm:$0xf]
  %v23 = vld [vmem:[%s0 + $0x24] sm:$0xf]
  %v24 = vld [vmem:[%s0 + $0x28] sm:$0xf]
  %v25 = vld [vmem:[%s0 + $0x2c] sm:$0xf]
  %v26 = vld [vmem:[%s0 + $0x30] sm:$0xf]
  %v27 = vld [vmem:[%s0 + $0x34] sm:$0xf]
  %v28 = vld [vmem:[%s0 + $0x38] sm:$0xf]
  %v29 = vld [vmem:[%s0 + $0x3c] sm:$0xf]
  %v30 = vld [vmem:[%s1] sm:$0xf]
  %v31 = vld [vmem:[%s1 + $0x4] sm:$0xf]
  %v32 = vld [vmem:[%s1 + $0x8] sm:$0xf]
  %v33 = vld [vmem:[%s1 + $0xc] sm:$0xf]
  %v34 = vld [vmem:[%s1 + $0x10] sm:$0xf]
  %v35 = vld [vmem:[%s1 + $0x14] sm:$0xf]
  %v36 = vld [vmem:[%s1 + $0x18] sm:$0xf]
  %v37 = vld [vmem:[%s1 + $0x1c] sm:$0xf]
  %v38 = vld [vmem:[%s1 + $0x20] sm:$0xf]
  %v39 = vld [vmem:[%s1 + $0x24] sm:$0xf]
  %v40 = vld [vmem:[%s1 + $0x28] sm:$0xf]
  %v41 = vld [vmem:[%s1 + $0x2c] sm:$0xf]
  %v42 = vld [vmem:[%s1 + $0x30] sm:$0xf]
  %v43 = vld [vmem:[%s1 + $0x34] sm:$0xf]
  %v44 = vld [vmem:[%s1 + $0x38] sm:$0xf]
  %v45 = vld [vmem:[%s1 + $0x3c] sm:$0xf]
  %v62 = vunpack.c.l.b16 %v14
  %v63 = vunpack.c.l.b16 %v15
  %v64 = vunpack.c.l.b16 %v16
  %v65 = vunpack.c.l.b16 %v17
  %v66 = vunpack.c.l.b16 %v18
  %v67 = vunpack.c.l.b16 %v19
  %v68 = vunpack.c.l.b16 %v20
  %v69 = vunpack.c.l.b16 %v21
  %v70 = vunpack.c.l.b16 %v22
  %v71 = vunpack.c.l.b16 %v23
  %v72 = vunpack.c.l.b16 %v24
  %v73 = vunpack.c.l.b16 %v25
  %v74 = vunpack.c.l.b16 %v26
  %v75 = vunpack.c.l.b16 %v27
  %v76 = vunpack.c.l.b16 %v28
  %v77 = vunpack.c.l.b16 %v29
  %v78 = vpack.c.b16 %v63, %v62
  %v79 = vpack.c.b16 %v65, %v64
  %v80 = vpack.c.b16 %v67, %v66
  %v81 = vpack.c.b16 %v69, %v68
  %v82 = vpack.c.b16 %v71, %v70
  %v83 = vpack.c.b16 %v73, %v72
  %v84 = vpack.c.b16 %v75, %v74
  %v85 = vpack.c.b16 %v77, %v76
  %v110 = vunpack.c.l.b16 %v30
  %v111 = vunpack.c.l.b16 %v31
  %v112 = vunpack.c.l.b16 %v32
  %v113 = vunpack.c.l.b16 %v33
  %v114 = vunpack.c.l.b16 %v34
  %v115 = vunpack.c.l.b16 %v35
  %v116 = vunpack.c.l.b16 %v36
  %v117 = vunpack.c.l.b16 %v37
  %v118 = vunpack.c.l.b16 %v38
  %v119 = vunpack.c.l.b16 %v39
  %v120 = vunpack.c.l.b16 %v40
  %v121 = vunpack.c.l.b16 %v41
  %v122 = vunpack.c.l.b16 %v42
  %v123 = vunpack.c.l.b16 %v43
  %v124 = vunpack.c.l.b16 %v44
  %v125 = vunpack.c.l.b16 %v45
  %v126 = vpack.c.b16 %v111, %v110
  %v127 = vpack.c.b16 %v113, %v112
  %v128 = vpack.c.b16 %v115, %v114
  %v129 = vpack.c.b16 %v117, %v116
  %v130 = vpack.c.b16 %v119, %v118
  %v131 = vpack.c.b16 %v121, %v120
  %v132 = vpack.c.b16 %v123, %v122
  %v133 = vpack.c.b16 %v125, %v124
  %142 = vmatprep.subr.bf16.mxu0 0
  %143 = vmatpush1.bf16.msra.mxu0 %v126
  %144 = vmatprep.subr.bf16.mxu0 0
  %145 = vmatpush1.bf16.msra.mxu0 %v127
  %146 = vmatprep.subr.bf16.mxu0 0
  %147 = vmatpush1.bf16.msra.mxu0 %v128
  %148 = vmatprep.subr.bf16.mxu0 0
  %149 = vmatpush1.bf16.msra.mxu0 %v129
  %150 = vmatprep.subr.bf16.mxu0 0
  %151 = vmatpush1.bf16.msra.mxu0 %v130
  %152 = vmatprep.subr.bf16.mxu0 0
  %153 = vmatpush1.bf16.msra.mxu0 %v131
  %154 = vmatprep.subr.bf16.mxu0 0
  %155 = vmatpush1.bf16.msra.mxu0 %v132
  %156 = vmatprep.subr.bf16.mxu0 0
  %157 = vmatpush1.bf16.msra.mxu0 %v133
  %158 = vmatprep.subr.bf16.mxu0 0
  %159 = vmatpush1.bf16.msra.mxu0 0
  %160 = vmatprep.subr.bf16.mxu0 0
  %161 = vmatpush1.bf16.msra.mxu0 0
  %162 = vmatprep.subr.bf16.mxu0 0
  %163 = vmatpush1.bf16.msra.mxu0 0
  %164 = vmatprep.subr.bf16.mxu0 0
  %165 = vmatpush1.bf16.msra.mxu0 0
  %166 = vmatprep.subr.bf16.mxu0 0
  %167 = vmatpush1.bf16.msra.mxu0 0
  %168 = vmatprep.subr.bf16.mxu0 0
  %169 = vmatpush1.bf16.msra.mxu0 0
  %170 = vmatprep.subr.bf16.mxu0 0
  %171 = vmatpush1.bf16.msra.mxu0 0
  %172 = vmatprep.subr.bf16.mxu0 0
  %173 = vmatpush1.bf16.msra.mxu0 0
  %174 = vmatprep.mubr.bf16.mxu0 0
  %175 = vmatmul.mubr.bf16.gmra.mrb[0].mxu0 %v78
  %v176 = vpop.f32.mrb[0].mxu0
  %v177 = vadd.f32 0.0, %v176
  %v178 = vpop.f32.mrb[0].mxu0
  %v179 = vpop.f32.mrb[0].mxu0
  %v180 = vadd.f32 0.0, %v179
  %v181 = vpop.f32.mrb[0].mxu0
  %182 = vmatprep.mubr.bf16.mxu0 0
  %183 = vmatmul.mubr.bf16.gmra.mrb[0].mxu0 %v79
  %v184 = vpop.f32.mrb[0].mxu0
  %v185 = vadd.f32 0.0, %v184
  %v186 = vpop.f32.mrb[0].mxu0
  %v187 = vpop.f32.mrb[0].mxu0
  %v188 = vadd.f32 0.0, %v187
  %v189 = vpop.f32.mrb[0].mxu0
  %190 = vmatprep.mubr.bf16.mxu0 0
  %191 = vmatmul.mubr.bf16.gmra.mrb[0].mxu0 %v80
  %v192 = vpop.f32.mrb[0].mxu0
  %v193 = vadd.f32 0.0, %v192
  %v194 = vpop.f32.mrb[0].mxu0
  %v195 = vpop.f32.mrb[0].mxu0
  %v196 = vadd.f32 0.0, %v195
  %v197 = vpop.f32.mrb[0].mxu0
  %198 = vmatprep.mubr.bf16.mxu0 0
  %199 = vmatmul.mubr.bf16.gmra.mrb[0].mxu0 %v81
  %v200 = vpop.f32.mrb[0].mxu0
  %v201 = vadd.f32 0.0, %v200
  %v202 = vpop.f32.mrb[0].mxu0
  %v203 = vpop.f32.mrb[0].mxu0
  %v204 = vadd.f32 0.0, %v203
  %v205 = vpop.f32.mrb[0].mxu0
  %206 = vmatprep.mubr.bf16.mxu0 0
  %207 = vmatmul.mubr.bf16.gmra.mrb[0].mxu0 %v82
  %v208 = vpop.f32.mrb[0].mxu0
  %v209 = vadd.f32 0.0, %v208
  %v210 = vpop.f32.mrb[0].mxu0
  %v211 = vpop.f32.mrb[0].mxu0
  %v212 = vadd.f32 0.0, %v211
  %v213 = vpop.f32.mrb[0].mxu0
  %214 = vmatprep.mubr.bf16.mxu0 0
  %215 = vmatmul.mubr.bf16.gmra.mrb[0].mxu0 %v83
  %v216 = vpop.f32.mrb[0].mxu0
  %v217 = vadd.f32 0.0, %v216
  %v218 = vpop.f32.mrb[0].mxu0
  %v219 = vpop.f32.mrb[0].mxu0
  %v220 = vadd.f32 0.0, %v219
  %v221 = vpop.f32.mrb[0].mxu0
  %222 = vmatprep.mubr.bf16.mxu0 0
  %223 = vmatmul.mubr.bf16.gmra.mrb[0].mxu0 %v84
  %v224 = vpop.f32.mrb[0].mxu0
  %v225 = vadd.f32 0.0, %v224
  %v226 = vpop.f32.mrb[0].mxu0
  %v227 = vpop.f32.mrb[0].mxu0
  %v228 = vadd.f32 0.0, %v227
  %v229 = vpop.f32.mrb[0].mxu0
  %230 = vmatprep.mubr.bf16.mxu0 0
  %231 = vmatmul.mubr.bf16.gmra.mrb[0].mxu0 %v85
  %v232 = vpop.f32.mrb[0].mxu0
  %v233 = vadd.f32 0.0, %v232
  %v234 = vpop.f32.mrb[0].mxu0
  %v235 = vpop.f32.mrb[0].mxu0
  %v236 = vadd.f32 0.0, %v235
  %v237 = vpop.f32.mrb[0].mxu0
  %238 = vdwg.mxu0
  %239 = vst [vmem:[%s2] sm:$0xff] %v177
  %240 = vst [vmem:[%s2 + $0x8] sm:$0xff] %v180
  %241 = vst [vmem:[%s2 + $0x10] sm:$0xff] %v185
  %242 = vst [vmem:[%s2 + $0x18] sm:$0xff] %v188
  %243 = vst [vmem:[%s2 + $0x20] sm:$0xff] %v193
  %244 = vst [vmem:[%s2 + $0x28] sm:$0xff] %v196
  %245 = vst [vmem:[%s2 + $0x30] sm:$0xff] %v201
  %246 = vst [vmem:[%s2 + $0x38] sm:$0xff] %v204
  %247 = vst [vmem:[%s2 + $0x40] sm:$0xff] %v209
  %248 = vst [vmem:[%s2 + $0x48] sm:$0xff] %v212
  %249 = vst [vmem:[%s2 + $0x50] sm:$0xff] %v217
  %250 = vst [vmem:[%s2 + $0x58] sm:$0xff] %v220
  %251 = vst [vmem:[%s2 + $0x60] sm:$0xff] %v225
  %252 = vst [vmem:[%s2 + $0x68] sm:$0xff] %v228
  %253 = vst [vmem:[%s2 + $0x70] sm:$0xff] %v233
  %254 = vst [vmem:[%s2 + $0x78] sm:$0xff] %v236
  %p255 = scmp.eq.s32.totalorder 0, 0
  // Predicated region
  $region10: #{res_module_forward.6} parent=0 // pred_check
    %p256 = pneg %p255
  $region11: #{res_module_forward.6} parent=0 // pred_check_branch
    %258 = sbr.rel (%p256) target = $region13
  $region12: #{res_module_forward.6} parent=0 // pred_region
    %259 = vst [vmem:[%s3] sm:$0xff] 0.0
  $region13: #{res_module_forward.6} parent=0 // pred_fallthru
    _
  %v260 = vadd.f32 %v177, %v180
  %v261 = vadd.f32 %v260, %v185
  %v262 = vadd.f32 %v261, %v188
  %v263 = vadd.f32 %v262, %v193
  %v264 = vadd.f32 %v263, %v196
  %v265 = vadd.f32 %v264, %v201
  %v266 = vadd.f32 %v265, %v204
  %v267 = vadd.f32 %v266, %v209
  %v268 = vadd.f32 %v267, %v212
  %v269 = vadd.f32 %v268, %v217
  %v270 = vadd.f32 %v269, %v220
  %v271 = vadd.f32 %v270, %v225
  %v272 = vadd.f32 %v271, %v228
  %v273 = vadd.f32 %v272, %v233
  %v274 = vadd.f32 %v273, %v236
  %v275 = vrot.slane %v274, 4
  %v276 = vadd.f32 %v274, %v275
  %v277 = vrot.slane %v276, 2
  %v278 = vadd.f32 %v276, %v277
  %v279 = vrot.slane %v278, 1
  %v280 = vadd.f32 %v278, %v279
  %v281 = vmul.f32 %v177, %v177
  %v282 = vmul.f32 %v180, %v180
  %v283 = vmul.f32 %v185, %v185
  %v284 = vmul.f32 %v188, %v188
  %v285 = vmul.f32 %v193, %v193
  %v286 = vmul.f32 %v196, %v196
  %v287 = vmul.f32 %v201, %v201
  %v288 = vmul.f32 %v204, %v204
  %v289 = vmul.f32 %v209, %v209
  %v290 = vmul.f32 %v212, %v212
  %v291 = vmul.f32 %v217, %v217
  %v292 = vmul.f32 %v220, %v220
  %v293 = vmul.f32 %v225, %v225
  %v294 = vmul.f32 %v228, %v228
  %v295 = vmul.f32 %v233, %v233
  %v296 = vmul.f32 %v236, %v236
  %v297 = vadd.f32 %v281, %v282
  %v298 = vadd.f32 %v297, %v283
  %v299 = vadd.f32 %v298, %v284
  %v300 = vadd.f32 %v299, %v285
  %v301 = vadd.f32 %v300, %v286
  %v302 = vadd.f32 %v301, %v287
  %v303 = vadd.f32 %v302, %v288
  %v304 = vadd.f32 %v303, %v289
  %v305 = vadd.f32 %v304, %v290
  %v306 = vadd.f32 %v305, %v291
  %v307 = vadd.f32 %v306, %v292
  %v308 = vadd.f32 %v307, %v293
  %v309 = vadd.f32 %v308, %v294
  %v310 = vadd.f32 %v309, %v295
  %v311 = vadd.f32 %v310, %v296
  %v312 = vrot.slane %v311, 4
  %v313 = vadd.f32 %v311, %v312
  %v314 = vrot.slane %v313, 2
  %v315 = vadd.f32 %v313, %v314
  %v316 = vrot.slane %v315, 1
  %v317 = vadd.f32 %v315, %v316
  %v318 = vld [vmem:[%s3] sm:$0xff]
  %vm319 = vcmask 1040384
  %v320 = vsel %vm319, %v280, %v317
  %vm321 = vcmask 1041408
  %v322 = vsel %vm321, %v320, 0.0
  %v323 = vadd.f32 %v318, %v322
  %324 = vst [vmem:[%s3] sm:$0xff] %v323
  // Predicated region
  $region14: #{res_module_forward.6} parent=0 // pred_check
    _
  $region15: #{res_module_forward.6} parent=0 // pred_check_branch
    %326 = sbr.rel (0) target = $region17
  $region16: #{res_module_forward.6} parent=0 // pred_region
    _
  $region17: #{res_module_forward.6} parent=0 // pred_fallthru
    _
  // Predicated region
  $region18: #{res_module_forward.6} parent=0 // pred_check
    _
  $region19: #{res_module_forward.6} parent=0 // pred_check_branch
    %328 = sbr.rel (0) target = $region21
  $region20: #{res_module_forward.6} parent=0 // pred_region
    _
  $region21: #{res_module_forward.6} parent=0 // pred_fallthru
    _
  // Predicated region
  $region22: #{res_module_forward.6} parent=0 // pred_check
    _
  $region23: #{res_module_forward.6} parent=0 // pred_check_branch
    %330 = sbr.rel (0) target = $region25
  $region24: #{res_module_forward.6} parent=0 // pred_region
    _
  $region25: #{res_module_forward.6} parent=0 // pred_fallthru
    _
  // Predicated region
  $region26: #{res_module_forward.6} parent=0 // pred_check
    _
  $region27: #{res_module_forward.6} parent=0 // pred_check_branch
    %332 = sbr.rel (0) target = $region29
  $region28: #{res_module_forward.6} parent=0 // pred_region
    _
  $region29: #{res_module_forward.6} parent=0 // pred_fallthru
    _

// kernel: res_module_forward.7
$region0: #{res_module_forward.7}
  #allocation0 [shape = 'u32[]', space=smem, size = 0x4, offset = 0x4, fixed_abs, tag = 'smem constant byte address 0x4 - core index']
  #allocation1 [shape = 'u32[144,128]{1,0:T(1,128)}', space=vmem, size = 0x12000, scoped, tag = 'internal scratch']
  %s0 = inlined_call_operand.vmem [shape: f32[128,128], index: 0, kind: input, shape index: {}]
  %s1 = inlined_call_operand.vmem [shape: f32[1,128], index: 1, kind: input, shape index: {}]
  %s2 = inlined_call_operand.vmem [shape: f32[1,128], index: 2, kind: input, shape index: {}]
  %s3 = inlined_call_operand.vmem [shape: f32[128,128], index: 3, kind: output, shape index: {}]
  %s4 = sld [smem:[#allocation0]]
  $region22: #{res_module_forward.7} parent=0
    _
  %s6 = ssub.s32 1, %s4
  %s7 = scalar_select 0, %s6, %s4
  // Predicated region
  $region2: #{res_module_forward.7} parent=0 // pred_check
    _
  $region3: #{res_module_forward.7} parent=0 // pred_check_branch
    %9 = sbr.rel (0) target = $region5
  $region4: #{res_module_forward.7} parent=0 // pred_region
    _
  $region5: #{res_module_forward.7} parent=0 // pred_fallthru
    _
  // Predicated region
  $region6: #{res_module_forward.7} parent=0 // pred_check
    _
  $region7: #{res_module_forward.7} parent=0 // pred_check_branch
    %11 = sbr.rel (0) target = $region9
  $region8: #{res_module_forward.7} parent=0 // pred_region
    _
  $region9: #{res_module_forward.7} parent=0 // pred_fallthru
    _
  // Predicated region
  $region10: #{res_module_forward.7} parent=0 // pred_check
    _
  $region11: #{res_module_forward.7} parent=0 // pred_check_branch
    %13 = sbr.rel (0) target = $region13
  $region12: #{res_module_forward.7} parent=0 // pred_region
    _
  $region13: #{res_module_forward.7} parent=0 // pred_fallthru
    _
  %v14 = vld [vmem:[%s0] sm:$0xff]
  %v15 = vld [vmem:[%s0 + $0x8] sm:$0xff]
  %v16 = vld [vmem:[%s0 + $0x10] sm:$0xff]
  %v17 = vld [vmem:[%s0 + $0x18] sm:$0xff]
  %v18 = vld [vmem:[%s0 + $0x20] sm:$0xff]
  %v19 = vld [vmem:[%s0 + $0x28] sm:$0xff]
  %v20 = vld [vmem:[%s0 + $0x30] sm:$0xff]
  %v21 = vld [vmem:[%s0 + $0x38] sm:$0xff]
  %v22 = vld [vmem:[%s0 + $0x40] sm:$0xff]
  %v23 = vld [vmem:[%s0 + $0x48] sm:$0xff]
  %v24 = vld [vmem:[%s0 + $0x50] sm:$0xff]
  %v25 = vld [vmem:[%s0 + $0x58] sm:$0xff]
  %v26 = vld [vmem:[%s0 + $0x60] sm:$0xff]
  %v27 = vld [vmem:[%s0 + $0x68] sm:$0xff]
  %v28 = vld [vmem:[%s0 + $0x70] sm:$0xff]
  %v29 = vld [vmem:[%s0 + $0x78] sm:$0xff]
  %v30 = vld [vmem:[%s1] sm:$0x1]
  %v32 = vlaneseq
  %v33 = vshrl.u32 %v32, 7
  %v34 = vsub.s32 0, %v33
  %v35 = vrot.slane %v30, %v34
  %v37 = vmul.f32 %v14, %v35
  %v38 = vmul.f32 %v15, %v35
  %v39 = vmul.f32 %v16, %v35
  %v40 = vmul.f32 %v17, %v35
  %v41 = vmul.f32 %v18, %v35
  %v42 = vmul.f32 %v19, %v35
  %v43 = vmul.f32 %v20, %v35
  %v44 = vmul.f32 %v21, %v35
  %v45 = vmul.f32 %v22, %v35
  %v46 = vmul.f32 %v23, %v35
  %v47 = vmul.f32 %v24, %v35
  %v48 = vmul.f32 %v25, %v35
  %v49 = vmul.f32 %v26, %v35
  %v50 = vmul.f32 %v27, %v35
  %v51 = vmul.f32 %v28, %v35
  %v52 = vmul.f32 %v29, %v35
  %v53 = vld [vmem:[%s2] sm:$0x1]
  %v55 = vlaneseq
  %v56 = vshrl.u32 %v55, 7
  %v57 = vsub.s32 0, %v56
  %v58 = vrot.slane %v53, %v57
  %v60 = vadd.f32 %v37, %v58
  %v61 = vadd.f32 %v38, %v58
  %v62 = vadd.f32 %v39, %v58
  %v63 = vadd.f32 %v40, %v58
  %v64 = vadd.f32 %v41, %v58
  %v65 = vadd.f32 %v42, %v58
  %v66 = vadd.f32 %v43, %v58
  %v67 = vadd.f32 %v44, %v58
  %v68 = vadd.f32 %v45, %v58
  %v69 = vadd.f32 %v46, %v58
  %v70 = vadd.f32 %v47, %v58
  %v71 = vadd.f32 %v48, %v58
  %v72 = vadd.f32 %v49, %v58
  %v73 = vadd.f32 %v50, %v58
  %v74 = vadd.f32 %v51, %v58
  %v75 = vadd.f32 %v52, %v58
  %v76 = vmax.f32 %v60, 0.0
  %v77 = vmax.f32 %v61, 0.0
  %v78 = vmax.f32 %v62, 0.0
  %v79 = vmax.f32 %v63, 0.0
  %v80 = vmax.f32 %v64, 0.0
  %v81 = vmax.f32 %v65, 0.0
  %v82 = vmax.f32 %v66, 0.0
  %v83 = vmax.f32 %v67, 0.0
  %v84 = vmax.f32 %v68, 0.0
  %v85 = vmax.f32 %v69, 0.0
  %v86 = vmax.f32 %v70, 0.0
  %v87 = vmax.f32 %v71, 0.0
  %v88 = vmax.f32 %v72, 0.0
  %v89 = vmax.f32 %v73, 0.0
  %v90 = vmax.f32 %v74, 0.0
  %v91 = vmax.f32 %v75, 0.0
  %92 = vst [vmem:[%s3] sm:$0xff] %v76
  %93 = vst [vmem:[%s3 + $0x8] sm:$0xff] %v77
  %94 = vst [vmem:[%s3 + $0x10] sm:$0xff] %v78
  %95 = vst [vmem:[%s3 + $0x18] sm:$0xff] %v79
  %96 = vst [vmem:[%s3 + $0x20] sm:$0xff] %v80
  %97 = vst [vmem:[%s3 + $0x28] sm:$0xff] %v81
  %98 = vst [vmem:[%s3 + $0x30] sm:$0xff] %v82
  %99 = vst [vmem:[%s3 + $0x38] sm:$0xff] %v83
  %100 = vst [vmem:[%s3 + $0x40] sm:$0xff] %v84
  %101 = vst [vmem:[%s3 + $0x48] sm:$0xff] %v85
  %102 = vst [vmem:[%s3 + $0x50] sm:$0xff] %v86
  %103 = vst [vmem:[%s3 + $0x58] sm:$0xff] %v87
  %104 = vst [vmem:[%s3 + $0x60] sm:$0xff] %v88
  %105 = vst [vmem:[%s3 + $0x68] sm:$0xff] %v89
  %106 = vst [vmem:[%s3 + $0x70] sm:$0xff] %v90
  %107 = vst [vmem:[%s3 + $0x78] sm:$0xff] %v91
  // Predicated region
  $region14: #{res_module_forward.7} parent=0 // pred_check
    _
  $region15: #{res_module_forward.7} parent=0 // pred_check_branch
    %109 = sbr.rel (0) target = $region17
  $region16: #{res_module_forward.7} parent=0 // pred_region
    _
  $region17: #{res_module_forward.7} parent=0 // pred_fallthru
    _
  // Predicated region
  $region18: #{res_module_forward.7} parent=0 // pred_check
    _
  $region19: #{res_module_forward.7} parent=0 // pred_check_branch
    %111 = sbr.rel (0) target = $region21
  $region20: #{res_module_forward.7} parent=0 // pred_region
    _
  $region21: #{res_module_forward.7} parent=0 // pred_fallthru
    _

// kernel: res_module_forward.11
$region0: #{res_module_forward.11}
  #allocation0 [shape = 'u32[]', space=smem, size = 0x4, offset = 0x4, fixed_abs, tag = 'smem constant byte address 0x4 - core index']
  #allocation1 [shape = 'u32[144,128]{1,0:T(1,128)}', space=vmem, size = 0x12000, scoped, tag = 'internal scratch']
  %s0 = inlined_call_operand.vmem [shape: f32[128,128], index: 0, kind: input, shape index: {}]
  %s1 = inlined_call_operand.vmem [shape: f32[1,128], index: 1, kind: input, shape index: {}]
  %s2 = inlined_call_operand.vmem [shape: f32[1,128], index: 2, kind: input, shape index: {}]
  %s3 = inlined_call_operand.vmem [shape: f32[128,128], index: 3, kind: input, shape index: {}]
  %s4 = inlined_call_operand.vmem [shape: f32[128,128], index: 4, kind: output, shape index: {}]
  %s5 = sld [smem:[#allocation0]]
  $region26: #{res_module_forward.11} parent=0
    _
  %s7 = ssub.s32 1, %s5
  %s8 = scalar_select 0, %s7, %s5
  // Predicated region
  $region2: #{res_module_forward.11} parent=0 // pred_check
    _
  $region3: #{res_module_forward.11} parent=0 // pred_check_branch
    %10 = sbr.rel (0) target = $region5
  $region4: #{res_module_forward.11} parent=0 // pred_region
    _
  $region5: #{res_module_forward.11} parent=0 // pred_fallthru
    _
  // Predicated region
  $region6: #{res_module_forward.11} parent=0 // pred_check
    _
  $region7: #{res_module_forward.11} parent=0 // pred_check_branch
    %12 = sbr.rel (0) target = $region9
  $region8: #{res_module_forward.11} parent=0 // pred_region
    _
  $region9: #{res_module_forward.11} parent=0 // pred_fallthru
    _
  // Predicated region
  $region10: #{res_module_forward.11} parent=0 // pred_check
    _
  $region11: #{res_module_forward.11} parent=0 // pred_check_branch
    %14 = sbr.rel (0) target = $region13
  $region12: #{res_module_forward.11} parent=0 // pred_region
    _
  $region13: #{res_module_forward.11} parent=0 // pred_fallthru
    _
  // Predicated region
  $region14: #{res_module_forward.11} parent=0 // pred_check
    _
  $region15: #{res_module_forward.11} parent=0 // pred_check_branch
    %16 = sbr.rel (0) target = $region17
  $region16: #{res_module_forward.11} parent=0 // pred_region
    _
  $region17: #{res_module_forward.11} parent=0 // pred_fallthru
    _
  %v17 = vld [vmem:[%s0] sm:$0xff]
  %v18 = vld [vmem:[%s0 + $0x8] sm:$0xff]
  %v19 = vld [vmem:[%s0 + $0x10] sm:$0xff]
  %v20 = vld [vmem:[%s0 + $0x18] sm:$0xff]
  %v21 = vld [vmem:[%s0 + $0x20] sm:$0xff]
  %v22 = vld [vmem:[%s0 + $0x28] sm:$0xff]
  %v23 = vld [vmem:[%s0 + $0x30] sm:$0xff]
  %v24 = vld [vmem:[%s0 + $0x38] sm:$0xff]
  %v25 = vld [vmem:[%s0 + $0x40] sm:$0xff]
  %v26 = vld [vmem:[%s0 + $0x48] sm:$0xff]
  %v27 = vld [vmem:[%s0 + $0x50] sm:$0xff]
  %v28 = vld [vmem:[%s0 + $0x58] sm:$0xff]
  %v29 = vld [vmem:[%s0 + $0x60] sm:$0xff]
  %v30 = vld [vmem:[%s0 + $0x68] sm:$0xff]
  %v31 = vld [vmem:[%s0 + $0x70] sm:$0xff]
  %v32 = vld [vmem:[%s0 + $0x78] sm:$0xff]
  %v33 = vld [vmem:[%s1] sm:$0x1]
  %v35 = vlaneseq
  %v36 = vshrl.u32 %v35, 7
  %v37 = vsub.s32 0, %v36
  %v38 = vrot.slane %v33, %v37
  %v40 = vmul.f32 %v17, %v38
  %v41 = vmul.f32 %v18, %v38
  %v42 = vmul.f32 %v19, %v38
  %v43 = vmul.f32 %v20, %v38
  %v44 = vmul.f32 %v21, %v38
  %v45 = vmul.f32 %v22, %v38
  %v46 = vmul.f32 %v23, %v38
  %v47 = vmul.f32 %v24, %v38
  %v48 = vmul.f32 %v25, %v38
  %v49 = vmul.f32 %v26, %v38
  %v50 = vmul.f32 %v27, %v38
  %v51 = vmul.f32 %v28, %v38
  %v52 = vmul.f32 %v29, %v38
  %v53 = vmul.f32 %v30, %v38
  %v54 = vmul.f32 %v31, %v38
  %v55 = vmul.f32 %v32, %v38
  %v56 = vld [vmem:[%s2] sm:$0x1]
  %v58 = vlaneseq
  %v59 = vshrl.u32 %v58, 7
  %v60 = vsub.s32 0, %v59
  %v61 = vrot.slane %v56, %v60
  %v63 = vadd.f32 %v40, %v61
  %v64 = vadd.f32 %v41, %v61
  %v65 = vadd.f32 %v42, %v61
  %v66 = vadd.f32 %v43, %v61
  %v67 = vadd.f32 %v44, %v61
  %v68 = vadd.f32 %v45, %v61
  %v69 = vadd.f32 %v46, %v61
  %v70 = vadd.f32 %v47, %v61
  %v71 = vadd.f32 %v48, %v61
  %v72 = vadd.f32 %v49, %v61
  %v73 = vadd.f32 %v50, %v61
  %v74 = vadd.f32 %v51, %v61
  %v75 = vadd.f32 %v52, %v61
  %v76 = vadd.f32 %v53, %v61
  %v77 = vadd.f32 %v54, %v61
  %v78 = vadd.f32 %v55, %v61
  %v79 = vld [vmem:[%s3] sm:$0xff]
  %v80 = vld [vmem:[%s3 + $0x8] sm:$0xff]
  %v81 = vld [vmem:[%s3 + $0x10] sm:$0xff]
  %v82 = vld [vmem:[%s3 + $0x18] sm:$0xff]
  %v83 = vld [vmem:[%s3 + $0x20] sm:$0xff]
  %v84 = vld [vmem:[%s3 + $0x28] sm:$0xff]
  %v85 = vld [vmem:[%s3 + $0x30] sm:$0xff]
  %v86 = vld [vmem:[%s3 + $0x38] sm:$0xff]
  %v87 = vld [vmem:[%s3 + $0x40] sm:$0xff]
  %v88 = vld [vmem:[%s3 + $0x48] sm:$0xff]
  %v89 = vld [vmem:[%s3 + $0x50] sm:$0xff]
  %v90 = vld [vmem:[%s3 + $0x58] sm:$0xff]
  %v91 = vld [vmem:[%s3 + $0x60] sm:$0xff]
  %v92 = vld [vmem:[%s3 + $0x68] sm:$0xff]
  %v93 = vld [vmem:[%s3 + $0x70] sm:$0xff]
  %v94 = vld [vmem:[%s3 + $0x78] sm:$0xff]
  %v95 = vadd.f32 %v63, %v79
  %v96 = vadd.f32 %v64, %v80
  %v97 = vadd.f32 %v65, %v81
  %v98 = vadd.f32 %v66, %v82
  %v99 = vadd.f32 %v67, %v83
  %v100 = vadd.f32 %v68, %v84
  %v101 = vadd.f32 %v69, %v85
  %v102 = vadd.f32 %v70, %v86
  %v103 = vadd.f32 %v71, %v87
  %v104 = vadd.f32 %v72, %v88
  %v105 = vadd.f32 %v73, %v89
  %v106 = vadd.f32 %v74, %v90
  %v107 = vadd.f32 %v75, %v91
  %v108 = vadd.f32 %v76, %v92
  %v109 = vadd.f32 %v77, %v93
  %v110 = vadd.f32 %v78, %v94
  %v111 = vmax.f32 %v95, 0.0
  %v112 = vmax.f32 %v96, 0.0
  %v113 = vmax.f32 %v97, 0.0
  %v114 = vmax.f32 %v98, 0.0
  %v115 = vmax.f32 %v99, 0.0
  %v116 = vmax.f32 %v100, 0.0
  %v117 = vmax.f32 %v101, 0.0
  %v118 = vmax.f32 %v102, 0.0
  %v119 = vmax.f32 %v103, 0.0
  %v120 = vmax.f32 %v104, 0.0
  %v121 = vmax.f32 %v105, 0.0
  %v122 = vmax.f32 %v106, 0.0
  %v123 = vmax.f32 %v107, 0.0
  %v124 = vmax.f32 %v108, 0.0
  %v125 = vmax.f32 %v109, 0.0
  %v126 = vmax.f32 %v110, 0.0
  %127 = vst [vmem:[%s4] sm:$0xff] %v111
  %128 = vst [vmem:[%s4 + $0x8] sm:$0xff] %v112
  %129 = vst [vmem:[%s4 + $0x10] sm:$0xff] %v113
  %130 = vst [vmem:[%s4 + $0x18] sm:$0xff] %v114
  %131 = vst [vmem:[%s4 + $0x20] sm:$0xff] %v115
  %132 = vst [vmem:[%s4 + $0x28] sm:$0xff] %v116
  %133 = vst [vmem:[%s4 + $0x30] sm:$0xff] %v117
  %134 = vst [vmem:[%s4 + $0x38] sm:$0xff] %v118
  %135 = vst [vmem:[%s4 + $0x40] sm:$0xff] %v119
  %136 = vst [vmem:[%s4 + $0x48] sm:$0xff] %v120
  %137 = vst [vmem:[%s4 + $0x50] sm:$0xff] %v121
  %138 = vst [vmem:[%s4 + $0x58] sm:$0xff] %v122
  %139 = vst [vmem:[%s4 + $0x60] sm:$0xff] %v123
  %140 = vst [vmem:[%s4 + $0x68] sm:$0xff] %v124
  %141 = vst [vmem:[%s4 + $0x70] sm:$0xff] %v125
  %142 = vst [vmem:[%s4 + $0x78] sm:$0xff] %v126
  // Predicated region
  $region18: #{res_module_forward.11} parent=0 // pred_check
    _
  $region19: #{res_module_forward.11} parent=0 // pred_check_branch
    %144 = sbr.rel (0) target = $region21
  $region20: #{res_module_forward.11} parent=0 // pred_region
    _
  $region21: #{res_module_forward.11} parent=0 // pred_fallthru
    _
  // Predicated region
  $region22: #{res_module_forward.11} parent=0 // pred_check
    _
  $region23: #{res_module_forward.11} parent=0 // pred_check_branch
    %146 = sbr.rel (0) target = $region25
  $region24: #{res_module_forward.11} parent=0 // pred_region
    _
  $region25: #{res_module_forward.11} parent=0 // pred_fallthru
    _

// kernel: res_module_forward.9
$region0: #{res_module_forward.9}
  #allocation0 [shape = 'u32[]', space=smem, size = 0x4, offset = 0x4, fixed_abs, tag = 'smem constant byte address 0x4 - core index']
  #allocation1 [shape = 'u32[144,128]{1,0:T(1,128)}', space=vmem, size = 0x12000, scoped, tag = 'internal scratch']
  %s0 = inlined_call_operand.vmem [shape: f32[128,128], index: 0, kind: input, shape index: {}]
  %s1 = inlined_call_operand.vmem [shape: f32[1,128], index: 1, kind: input, shape index: {}]
  %s2 = inlined_call_operand.vmem [shape: f32[1,128], index: 2, kind: input, shape index: {}]
  %s3 = inlined_call_operand.vmem [shape: f32[128,128], index: 3, kind: output, shape index: {}]
  %s4 = sld [smem:[#allocation0]]
  $region22: #{res_module_forward.9} parent=0
    _
  %s6 = ssub.s32 1, %s4
  %s7 = scalar_select 0, %s6, %s4
  // Predicated region
  $region2: #{res_module_forward.9} parent=0 // pred_check
    _
  $region3: #{res_module_forward.9} parent=0 // pred_check_branch
    %9 = sbr.rel (0) target = $region5
  $region4: #{res_module_forward.9} parent=0 // pred_region
    _
  $region5: #{res_module_forward.9} parent=0 // pred_fallthru
    _
  // Predicated region
  $region6: #{res_module_forward.9} parent=0 // pred_check
    _
  $region7: #{res_module_forward.9} parent=0 // pred_check_branch
    %11 = sbr.rel (0) target = $region9
  $region8: #{res_module_forward.9} parent=0 // pred_region
    _
  $region9: #{res_module_forward.9} parent=0 // pred_fallthru
    _
  // Predicated region
  $region10: #{res_module_forward.9} parent=0 // pred_check
    _
  $region11: #{res_module_forward.9} parent=0 // pred_check_branch
    %13 = sbr.rel (0) target = $region13
  $region12: #{res_module_forward.9} parent=0 // pred_region
    _
  $region13: #{res_module_forward.9} parent=0 // pred_fallthru
    _
  %v14 = vld [vmem:[%s0] sm:$0xff]
  %v15 = vld [vmem:[%s0 + $0x8] sm:$0xff]
  %v16 = vld [vmem:[%s0 + $0x10] sm:$0xff]
  %v17 = vld [vmem:[%s0 + $0x18] sm:$0xff]
  %v18 = vld [vmem:[%s0 + $0x20] sm:$0xff]
  %v19 = vld [vmem:[%s0 + $0x28] sm:$0xff]
  %v20 = vld [vmem:[%s0 + $0x30] sm:$0xff]
  %v21 = vld [vmem:[%s0 + $0x38] sm:$0xff]
  %v22 = vld [vmem:[%s0 + $0x40] sm:$0xff]
  %v23 = vld [vmem:[%s0 + $0x48] sm:$0xff]
  %v24 = vld [vmem:[%s0 + $0x50] sm:$0xff]
  %v25 = vld [vmem:[%s0 + $0x58] sm:$0xff]
  %v26 = vld [vmem:[%s0 + $0x60] sm:$0xff]
  %v27 = vld [vmem:[%s0 + $0x68] sm:$0xff]
  %v28 = vld [vmem:[%s0 + $0x70] sm:$0xff]
  %v29 = vld [vmem:[%s0 + $0x78] sm:$0xff]
  %v30 = vld [vmem:[%s1] sm:$0x1]
  %v32 = vlaneseq
  %v33 = vshrl.u32 %v32, 7
  %v34 = vsub.s32 0, %v33
  %v35 = vrot.slane %v30, %v34
  %v37 = vmul.f32 %v14, %v35
  %v38 = vmul.f32 %v15, %v35
  %v39 = vmul.f32 %v16, %v35
  %v40 = vmul.f32 %v17, %v35
  %v41 = vmul.f32 %v18, %v35
  %v42 = vmul.f32 %v19, %v35
  %v43 = vmul.f32 %v20, %v35
  %v44 = vmul.f32 %v21, %v35
  %v45 = vmul.f32 %v22, %v35
  %v46 = vmul.f32 %v23, %v35
  %v47 = vmul.f32 %v24, %v35
  %v48 = vmul.f32 %v25, %v35
  %v49 = vmul.f32 %v26, %v35
  %v50 = vmul.f32 %v27, %v35
  %v51 = vmul.f32 %v28, %v35
  %v52 = vmul.f32 %v29, %v35
  %v53 = vld [vmem:[%s2] sm:$0x1]
  %v55 = vlaneseq
  %v56 = vshrl.u32 %v55, 7
  %v57 = vsub.s32 0, %v56
  %v58 = vrot.slane %v53, %v57
  %v60 = vadd.f32 %v37, %v58
  %v61 = vadd.f32 %v38, %v58
  %v62 = vadd.f32 %v39, %v58
  %v63 = vadd.f32 %v40, %v58
  %v64 = vadd.f32 %v41, %v58
  %v65 = vadd.f32 %v42, %v58
  %v66 = vadd.f32 %v43, %v58
  %v67 = vadd.f32 %v44, %v58
  %v68 = vadd.f32 %v45, %v58
  %v69 = vadd.f32 %v46, %v58
  %v70 = vadd.f32 %v47, %v58
  %v71 = vadd.f32 %v48, %v58
  %v72 = vadd.f32 %v49, %v58
  %v73 = vadd.f32 %v50, %v58
  %v74 = vadd.f32 %v51, %v58
  %v75 = vadd.f32 %v52, %v58
  %76 = vst [vmem:[%s3] sm:$0xff] %v60
  %77 = vst [vmem:[%s3 + $0x8] sm:$0xff] %v61
  %78 = vst [vmem:[%s3 + $0x10] sm:$0xff] %v62
  %79 = vst [vmem:[%s3 + $0x18] sm:$0xff] %v63
  %80 = vst [vmem:[%s3 + $0x20] sm:$0xff] %v64
  %81 = vst [vmem:[%s3 + $0x28] sm:$0xff] %v65
  %82 = vst [vmem:[%s3 + $0x30] sm:$0xff] %v66
  %83 = vst [vmem:[%s3 + $0x38] sm:$0xff] %v67
  %84 = vst [vmem:[%s3 + $0x40] sm:$0xff] %v68
  %85 = vst [vmem:[%s3 + $0x48] sm:$0xff] %v69
  %86 = vst [vmem:[%s3 + $0x50] sm:$0xff] %v70
  %87 = vst [vmem:[%s3 + $0x58] sm:$0xff] %v71
  %88 = vst [vmem:[%s3 + $0x60] sm:$0xff] %v72
  %89 = vst [vmem:[%s3 + $0x68] sm:$0xff] %v73
  %90 = vst [vmem:[%s3 + $0x70] sm:$0xff] %v74
  %91 = vst [vmem:[%s3 + $0x78] sm:$0xff] %v75
  // Predicated region
  $region14: #{res_module_forward.9} parent=0 // pred_check
    _
  $region15: #{res_module_forward.9} parent=0 // pred_check_branch
    %93 = sbr.rel (0) target = $region17
  $region16: #{res_module_forward.9} parent=0 // pred_region
    _
  $region17: #{res_module_forward.9} parent=0 // pred_fallthru
    _
  // Predicated region
  $region18: #{res_module_forward.9} parent=0 // pred_check
    _
  $region19: #{res_module_forward.9} parent=0 // pred_check_branch
    %95 = sbr.rel (0) target = $region21
  $region20: #{res_module_forward.9} parent=0 // pred_region
    _
  $region21: #{res_module_forward.9} parent=0 // pred_fallthru
    _

</llo_original>
